<compile_context>
chip_gen: v7x
topology: tpu7x:2x2x1
jax: 0.10.0
libtpu: 0.0.40
codegen_flags: <defaults>
</compile_context>

<pallas_src>
import functools

import jax
import jax.numpy as jnp
from jax.experimental import pallas as pl
from jax.experimental.pallas import tpu as pltpu


def add_and_norm_kernel(x_ref, x2_ref, gamma_ref, beta_ref, o_ref, *, eps, inv_h):
    # x_ref / x2_ref: (rows, H) tile in VMEM; gamma/beta: (1, H) f32, resident.
    s = x_ref[...].astype(jnp.float32) + x2_ref[...].astype(jnp.float32)

    # Single pass over the tile for both first and second moments (f32 accum).
    row_sum = jnp.sum(s, axis=-1, keepdims=True)
    row_sumsq = jnp.sum(s * s, axis=-1, keepdims=True)
    mean = row_sum * inv_h
    var = row_sumsq * inv_h - mean * mean          # biased variance, like torch LN
    var = jnp.maximum(var, 0.0)                    # guard against f32 cancellation
    inv = jax.lax.rsqrt(var + eps)

    # (s - mean) is formed exactly once here, fused with scale/shift/store.
    o_ref[...] = ((s - mean) * inv * gamma_ref[...] + beta_ref[...]).astype(o_ref.dtype)


def _sublane_pack(itemsize):
    # Sub-full row blocks must be a multiple of the sublane packing:
    # 8 rows for 4-byte dtypes, 16 for 2-byte, 32 for 1-byte.
    return max(8, 32 // max(itemsize, 1))


def _vmem_capacity_bytes():
    """Per-TensorCore VMEM capacity; falls back to 128 MiB if unqueryable."""
    try:
        info = pltpu.get_tpu_info()
        cap = getattr(info, "vmem_capacity_bytes", None)
        if cap:
            return int(cap)
    except Exception:
        pass
    return 128 << 20


def _per_row_vmem_bytes(H, itemsize):
    """VMEM bytes needed per tile row.

    I/O: x, y, out tiles, each double-buffered by the pipeline -> 3 * 2 * H * itemsize.
    f32 intermediates Mosaic materializes at multi-MiB tiles (the f32 sum `s`
    plus ~one more full-tile temp for the pre-cast output) -> ~2 * H * 4.
    """
    return 3 * 2 * H * itemsize + 2 * H * 4


def _pick_rows_per_tile(R, H, itemsize, vmem_capacity):
    """Pick a row tile so I/O double-buffers + f32 intermediates fit comfortably.

    Budget ~3/8 of VMEM capacity for tile bytes: ~48 MiB on 128 MiB parts
    (v5e/v6e) and ~24 MiB on 64 MiB v7x, leaving room for params, compiler
    scratch, and keeping 2-deep pipelining alive. Tiles stay large enough to
    amortize the ~0.35 us per-grid-step overhead.
    """
    pack = _sublane_pack(itemsize)
    per_row = _per_row_vmem_bytes(H, itemsize)
    budget = (vmem_capacity * 3) // 8
    rows = budget // per_row
    if vmem_capacity >= (96 << 20):
        # 128 MiB-VMEM parts (v5e/v6e): relax caps so small-H uses bigger tiles.
        cap = 2048 if itemsize <= 2 else 1024
    else:
        # v7x (64 MiB per TC): keep tiles modest so both TCs + scratch fit.
        cap = 1024 if itemsize <= 2 else 512
    rows = min(rows, cap)
    rows = max((rows // pack) * pack, pack)
    if rows >= R:
        return R  # full-extent block: always a legal block shape
    return rows


def add_and_norm(x, y, gamma, beta, *, eps=1e-5, rows_per_tile=None):
    """Fused (x + y) followed by LayerNorm over the last dim.

    x, y: (..., H). gamma, beta: (H,).
    """
    assert x.shape == y.shape
    H = x.shape[-1]
    assert gamma.shape == (H,) and beta.shape == (H,)

    orig_shape = x.shape
    x2 = x.reshape(-1, H)
    y2 = y.reshape(-1, H)
    R = x2.shape[0]
    itemsize = jnp.dtype(x.dtype).itemsize
    pack = _sublane_pack(itemsize)
    vmem_capacity = _vmem_capacity_bytes()

    if rows_per_tile is None:
        rows_per_tile = _pick_rows_per_tile(R, H, itemsize, vmem_capacity)
    else:
        # Guard user-supplied tiles against the (8, 128) block-shape rule.
        rows_per_tile = min(int(rows_per_tile), R)
        if rows_per_tile < R:
            rows_per_tile = max(pack, (rows_per_tile // pack) * pack)

    grid = (pl.cdiv(R, rows_per_tile),)

    # Cast params to f32 once here; constant index_map keeps them in VMEM.
    gamma2 = gamma.reshape(1, H).astype(jnp.float32)
    beta2 = beta.reshape(1, H).astype(jnp.float32)

    # Explicit VMEM budget: double-buffered I/O + f32 intermediates + params
    # + slack for compiler scratch; capped at 3/4 of physical capacity
    # (~48 MiB on v7x, ~96 MiB on v5e/v6e), never the full VMEM.
    io_bytes = 3 * 2 * rows_per_tile * H * itemsize
    interm_bytes = 2 * rows_per_tile * H * 4
    vmem_limit = io_bytes + interm_bytes + 2 * H * 4 + (4 << 20)
    vmem_limit = int(min(max(vmem_limit, 16 << 20), (vmem_capacity * 3) // 4))

    # TODO(synk): on v7x, verify both TensorCores get grid steps; if not, switch
    # to dimension_semantics=(pltpu.CORE_PARALLEL,) or an explicit core_map.
    # TODO(synk): if xprof shows exposed DMA at tile boundaries, sweep
    # pipeline_mode=pl.Buffered(3) on x/y with a correspondingly smaller tile.
    # TODO(synk): for H not a multiple of 128 (tiny hidden sizes), fold several
    # rows into the lane axis to avoid masked partial stores; irrelevant for
    # real LLM hidden sizes (1024/4096/8192).

    kernel = functools.partial(add_and_norm_kernel, eps=eps, inv_h=1.0 / H)

    out = pl.pallas_call(
        kernel,
        out_shape=jax.ShapeDtypeStruct((R, H), x.dtype),
        grid_spec=pltpu.PrefetchScalarGridSpec(
            num_scalar_prefetch=0,
            grid=grid,
            in_specs=[
                pl.BlockSpec((rows_per_tile, H), lambda i: (i, 0)),
                pl.BlockSpec((rows_per_tile, H), lambda i: (i, 0)),
                pl.BlockSpec((1, H), lambda i: (0, 0)),
                pl.BlockSpec((1, H), lambda i: (0, 0)),
            ],
            out_specs=pl.BlockSpec((rows_per_tile, H), lambda i: (i, 0)),
        ),
        compiler_params=pltpu.CompilerParams(
            dimension_semantics=("parallel",),
            vmem_limit_bytes=vmem_limit,
        ),
    )(x2, y2, gamma2, beta2)

    return out.reshape(orig_shape)


if __name__ == "__main__":
    B, S, H = 2, 8, 32
    key = jax.random.PRNGKey(0)
    kx, ky = jax.random.split(key)
    x = jax.random.normal(kx, (B, S, H), dtype=jnp.float32)
    y = jax.random.normal(ky, (B, S, H), dtype=jnp.float32)

    # Deterministic LayerNorm params (torch.nn.LayerNorm default init).
    gamma = jnp.ones((H,), dtype=jnp.float32)
    beta = jnp.zeros((H,), dtype=jnp.float32)

    out = add_and_norm(x, y, gamma, beta)
    jax.block_until_ready(out)

    # Reference check in plain JAX (mirrors torch: norm(add(x, y)), two-pass form).
    s = x + y
    mean = s.mean(-1, keepdims=True)
    var = ((s - mean) ** 2).mean(-1, keepdims=True)
    ref = (s - mean) / jnp.sqrt(var + 1e-5) * gamma + beta
    assert jnp.allclose(out, ref, atol=1e-4, rtol=1e-5), (
        float(jnp.max(jnp.abs(out - ref))))

    print("KERNEL_OK")
</pallas_src>

<mosaic_0001>
module attributes {stable_mosaic.version = 11 : i64} {
  func.func @add_and_norm_kernel(%arg0: i32, %arg1: memref<16x32xf32, #tpu.memory_space<vmem>>, %arg2: memref<16x32xf32, #tpu.memory_space<vmem>>, %arg3: memref<1x32xf32, #tpu.memory_space<vmem>>, %arg4: memref<1x32xf32, #tpu.memory_space<vmem>>, %arg5: memref<16x32xf32, #tpu.memory_space<vmem>>) attributes {dimension_semantics = [#tpu.dimension_semantics<parallel>], iteration_bounds = array<i64: 1>, scalar_prefetch = 0 : i64, scratch_operands = 0 : i64, tpu.core_type = #tpu.core_type<tc>, window_params = [{transform_indices = @transform_0, window_bounds = array<i64: 16, 32>}, {transform_indices = @transform_1, window_bounds = array<i64: 16, 32>}, {pipeline_mode = #tpu.pipeline_mode<synchronous>, transform_indices = @transform_2, window_bounds = array<i64: 1, 32>}, {pipeline_mode = #tpu.pipeline_mode<synchronous>, transform_indices = @transform_3, window_bounds = array<i64: 1, 32>}, {transform_indices = @transform_4, window_bounds = array<i64: 16, 32>}]} {
    %c0 = arith.constant 0 : index
    %c0_0 = arith.constant 0 : index
    %0 = vector.load %arg1[%c0, %c0_0] : memref<16x32xf32, #tpu.memory_space<vmem>>, vector<16x32xf32>
    %c0_1 = arith.constant 0 : index
    %c0_2 = arith.constant 0 : index
    %1 = vector.load %arg2[%c0_1, %c0_2] : memref<16x32xf32, #tpu.memory_space<vmem>>, vector<16x32xf32>
    %2 = arith.addf %0, %1 : vector<16x32xf32>
    %cst = arith.constant dense<0.000000e+00> : vector<16xf32>
    %3 = vector.multi_reduction <add>, %2, %cst [1] : vector<16x32xf32> to vector<16xf32>
    %4 = vector.shape_cast %3 : vector<16xf32> to vector<16x1xf32>
    %5 = arith.mulf %2, %2 : vector<16x32xf32>
    %cst_3 = arith.constant dense<0.000000e+00> : vector<16xf32>
    %6 = vector.multi_reduction <add>, %5, %cst_3 [1] : vector<16x32xf32> to vector<16xf32>
    %7 = vector.shape_cast %6 : vector<16xf32> to vector<16x1xf32>
    %cst_4 = arith.constant 3.125000e-02 : f32
    %8 = vector.broadcast %cst_4 : f32 to vector<16x1xf32>
    %9 = arith.mulf %4, %8 : vector<16x1xf32>
    %cst_5 = arith.constant 3.125000e-02 : f32
    %10 = vector.broadcast %cst_5 : f32 to vector<16x1xf32>
    %11 = arith.mulf %7, %10 : vector<16x1xf32>
    %12 = arith.mulf %9, %9 : vector<16x1xf32>
    %13 = arith.subf %11, %12 : vector<16x1xf32>
    %cst_6 = arith.constant 0.000000e+00 : f32
    %14 = vector.broadcast %cst_6 : f32 to vector<16x1xf32>
    %15 = arith.maximumf %13, %14 : vector<16x1xf32>
    %cst_7 = arith.constant 9.99999974E-6 : f32
    %16 = vector.broadcast %cst_7 : f32 to vector<16x1xf32>
    %17 = arith.addf %15, %16 : vector<16x1xf32>
    %18 = math.rsqrt %17 : vector<16x1xf32>
    %19 = vector.broadcast %9 : vector<16x1xf32> to vector<16x32xf32>
    %20 = arith.subf %2, %19 : vector<16x32xf32>
    %21 = vector.broadcast %18 : vector<16x1xf32> to vector<16x32xf32>
    %22 = arith.mulf %20, %21 : vector<16x32xf32>
    %c0_8 = arith.constant 0 : index
    %c0_9 = arith.constant 0 : index
    %23 = vector.load %arg3[%c0_8, %c0_9] : memref<1x32xf32, #tpu.memory_space<vmem>>, vector<1x32xf32>
    %24 = vector.broadcast %23 : vector<1x32xf32> to vector<16x32xf32>
    %25 = arith.mulf %22, %24 : vector<16x32xf32>
    %c0_10 = arith.constant 0 : index
    %c0_11 = arith.constant 0 : index
    %26 = vector.load %arg4[%c0_10, %c0_11] : memref<1x32xf32, #tpu.memory_space<vmem>>, vector<1x32xf32>
    %27 = vector.broadcast %26 : vector<1x32xf32> to vector<16x32xf32>
    %28 = arith.addf %25, %27 : vector<16x32xf32>
    %c0_12 = arith.constant 0 : index
    %c0_13 = arith.constant 0 : index
    %29 = vector.load %arg5[%c0_12, %c0_13] : memref<16x32xf32, #tpu.memory_space<vmem>>, vector<16x32xf32>
    tpu.vector_store %arg5[%c0_12, %c0_13], %28 {strides = array<i32>} : memref<16x32xf32, #tpu.memory_space<vmem>>, vector<16x32xf32>,
    return
  }
  func.func @transform_0(%arg0: i32) -> (i32, i32) {
    %c0_i32 = arith.constant 0 : i32
    %c0_i32_0 = arith.constant 0 : i32
    return %arg0, %c0_i32 : i32, i32
  }
  func.func @transform_1(%arg0: i32) -> (i32, i32) {
    %c0_i32 = arith.constant 0 : i32
    %c0_i32_0 = arith.constant 0 : i32
    return %arg0, %c0_i32 : i32, i32
  }
  func.func @transform_2(%arg0: i32) -> (i32, i32) {
    %c0_i32 = arith.constant 0 : i32
    %c0_i32_0 = arith.constant 0 : i32
    %c0_i32_1 = arith.constant 0 : i32
    return %c0_i32, %c0_i32_0 : i32, i32
  }
  func.func @transform_3(%arg0: i32) -> (i32, i32) {
    %c0_i32 = arith.constant 0 : i32
    %c0_i32_0 = arith.constant 0 : i32
    %c0_i32_1 = arith.constant 0 : i32
    return %c0_i32, %c0_i32_0 : i32, i32
  }
  func.func @transform_4(%arg0: i32) -> (i32, i32) {
    %c0_i32 = arith.constant 0 : i32
    %c0_i32_0 = arith.constant 0 : i32
    return %arg0, %c0_i32 : i32, i32
  }
}

</mosaic_0001>

<llo_original>
// kernel: tpu_custom_call.1
$region0: #{tpu_custom_call.1}
  #allocation0 [shape = 'u32[]', space=smem, size = 0x4, offset = 0x4, fixed_abs, tag = 'smem constant byte address 0x4 - core index']
  #allocation1 [shape = 'u32[144,128]{1,0:T(1,128)}', space=vmem, size = 0x12000, scoped, tag = 'internal scratch']
  %s0 = inlined_call_operand.hbm [shape: f32[16,32], index: 0, kind: input, shape index: {}]
  %s1 = inlined_call_operand.hbm [shape: f32[16,32], index: 1, kind: input, shape index: {}]
  %s2 = inlined_call_operand.vmem [shape: f32[1,32], index: 2, kind: input, shape index: {}]
  %s3 = inlined_call_operand.vmem [shape: f32[1,32], index: 3, kind: input, shape index: {}]
  %s4 = inlined_call_operand.hbm [shape: f32[16,32], index: 4, kind: output, shape index: {}]
  %s5 = sld [smem:[#allocation0]]
  $region34: #{tpu_custom_call.1} parent=0
    _
  %s7 = ssub.s32 1, %s5
  %s8 = scalar_select 0, %s7, %s5
  $region1: #{tpu_custom_call.1} parent=0
    #allocation2 [shape = 'u8[8192]{0}', space=vmem, size = 0x2000, scoped, tag = 'input window, operand 0, single buffered']
    #allocation3 [shape = 's32[1]{0}', space=sflag, size = 0x4, scoped, tag = 'scoped memory for tpu_custom_call.1']
    #allocation4 [shape = 's32[1]{0}', space=sflag, size = 0x4, scoped, tag = 'scoped memory for tpu_custom_call.1']
    #allocation5 [shape = 'u8[8192]{0}', space=vmem, size = 0x2000, scoped, tag = 'input window, operand 1, single buffered']
    #allocation6 [shape = 's32[1]{0}', space=sflag, size = 0x4, scoped, tag = 'scoped memory for tpu_custom_call.1']
    #allocation7 [shape = 'u8[8192]{0}', space=vmem, size = 0x2000, scoped, tag = 'output window, operand 0, single buffered']
    %9 = vsyncpa [#allocation3], 0
    %10 = vsyncpa [#allocation6], 0
    %11 = vsyncpa [#allocation4], 0
    // Predicated region
    $region2: #{tpu_custom_call.1} parent=1 // pred_check
      _
    $region3: #{tpu_custom_call.1} parent=1 // pred_check_branch
      %13 = sbr.rel (0) target = $region5
    $region4: #{tpu_custom_call.1} parent=1 // pred_region
      %s15 = ssub.s32 256, 256
      %16 = vsyncadd [#allocation3], %s15
      %s17 = sshll.u32 [#allocation2], 4
      %s18 = int_to_ptr.vmem [resolvable:$true] %s17
      %23 = dma.hbm_to_vmem [thread:$0]  %s0, 256, %s18, [#allocation3], 128, 128, 8
    $region5: #{tpu_custom_call.1} parent=1 // pred_fallthru
      _
    // Predicated region
    $region6: #{tpu_custom_call.1} parent=1 // pred_check
      _
    $region7: #{tpu_custom_call.1} parent=1 // pred_check_branch
      %25 = sbr.rel (0) target = $region9
    $region8: #{tpu_custom_call.1} parent=1 // pred_region
      %s27 = ssub.s32 256, 256
      %28 = vsyncadd [#allocation6], %s27
      %s29 = sshll.u32 [#allocation5], 4
      %s30 = int_to_ptr.vmem [resolvable:$true] %s29
      %35 = dma.hbm_to_vmem [thread:$0]  %s1, 256, %s30, [#allocation6], 128, 128, 8
    $region9: #{tpu_custom_call.1} parent=1 // pred_fallthru
      _
    // Predicated region
    $region10: #{tpu_custom_call.1} parent=1 // pred_check
      _
    $region11: #{tpu_custom_call.1} parent=1 // pred_check_branch
      %37 = sbr.rel (0) target = $region13
    $region12: #{tpu_custom_call.1} parent=1 // pred_region
      _
    $region13: #{tpu_custom_call.1} parent=1 // pred_fallthru
      _
    // Predicated region
    $region14: #{tpu_custom_call.1} parent=1 // pred_check
      _
    $region15: #{tpu_custom_call.1} parent=1 // pred_check_branch
      %39 = sbr.rel (0) target = $region17
    $region16: #{tpu_custom_call.1} parent=1 // pred_region
      _
    $region17: #{tpu_custom_call.1} parent=1 // pred_fallthru
      _
    // Predicated region
    $region18: #{tpu_custom_call.1} parent=1 // pred_check
      _
    $region19: #{tpu_custom_call.1} parent=1 // pred_check_branch
      %41 = sbr.rel (0) target = $region21
    $region20: #{tpu_custom_call.1} parent=1 // pred_region
      %42 = dma.done [#allocation3], 256
    $region21: #{tpu_custom_call.1} parent=1 // pred_fallthru
      _
    // Predicated region
    $region22: #{tpu_custom_call.1} parent=1 // pred_check
      _
    $region23: #{tpu_custom_call.1} parent=1 // pred_check_branch
      %44 = sbr.rel (0) target = $region25
    $region24: #{tpu_custom_call.1} parent=1 // pred_region
      %45 = dma.done [#allocation6], 256
    $region25: #{tpu_custom_call.1} parent=1 // pred_fallthru
      _
    %v46 = vld [vmem:[#allocation2] sm:$0xff]
    %v47 = vld [vmem:[#allocation2 + $0x8] sm:$0xff]
    %v48 = vld [vmem:[#allocation5] sm:$0xff]
    %v49 = vld [vmem:[#allocation5 + $0x8] sm:$0xff]
    %v50 = vadd.f32 %v46, %v48
    %v51 = vadd.f32 %v47, %v49
    %vm52 = vcmask 261120
    %v53 = vsel %vm52, %v50, 0.0
    %54 = vadd.xlane.f32.xlu0 %v53
    %v55 = vpop.xlane.xlu0 %54
    %v56 = vsel %vm52, %v51, 0.0
    %57 = vadd.xlane.f32.xlu0 %v56
    %v58 = vpop.xlane.xlu0 %57
    %v59 = vmul.f32 %v50, %v50
    %v60 = vmul.f32 %v51, %v51
    %v61 = vsel %vm52, %v59, 0.0
    %62 = vadd.xlane.f32.xlu0 %v61
    %v63 = vpop.xlane.xlu0 %62
    %v64 = vsel %vm52, %v60, 0.0
    %65 = vadd.xlane.f32.xlu0 %v64
    %v66 = vpop.xlane.xlu0 %65
    %v67 = vmul.f32 %v55, 0.03125
    %v68 = vmul.f32 %v58, 0.03125
    %v69 = vmul.f32 %v63, 0.03125
    %v70 = vmul.f32 %v66, 0.03125
    %v71 = vmul.f32 %v67, %v67
    %v72 = vmul.f32 %v68, %v68
    %v73 = vsub.f32 %v69, %v71
    %v74 = vsub.f32 %v70, %v72
    %v75 = vmax.f32 %v73, 0.0
    %v76 = vmax.f32 %v74, 0.0
    %v77 = vadd.f32 %v75, 1e-05
    %v78 = vadd.f32 %v76, 1e-05
    %v79 = vrsqrt.pop %v77
    %v80 = vrsqrt.pop %v78
    %v81 = vsub.f32 %v50, %v67
    %v82 = vsub.f32 %v51, %v68
    %v83 = vmul.f32 %v81, %v79
    %v84 = vmul.f32 %v82, %v80
    %v85 = vld [vmem:[%s2] sm:$0x1]
    %v87 = vlaneseq
    %v88 = vshrl.u32 %v87, 7
    %v89 = vsub.s32 0, %v88
    %v90 = vrot.slane %v85, %v89
    %v92 = vmul.f32 %v83, %v90
    %v93 = vmul.f32 %v84, %v90
    %v94 = vld [vmem:[%s3] sm:$0x1]
    %v96 = vlaneseq
    %v97 = vshrl.u32 %v96, 7
    %v98 = vsub.s32 0, %v97
    %v99 = vrot.slane %v94, %v98
    %v101 = vadd.f32 %v92, %v99
    %v102 = vadd.f32 %v93, %v99
    %103 = vst.msk [vmem:[#allocation7] sm:$0xff] %vm52, %v101
    %104 = vst.msk [vmem:[#allocation7 + $0x8] sm:$0xff] %vm52, %v102
    // Predicated region
    $region26: #{tpu_custom_call.1} parent=1 // pred_check
      _
    $region27: #{tpu_custom_call.1} parent=1 // pred_check_branch
      %106 = sbr.rel (0) target = $region29
    $region28: #{tpu_custom_call.1} parent=1 // pred_region
      %s108 = ssub.s32 256, 256
      %109 = vsyncadd [#allocation4], %s108
      %s110 = sshll.u32 [#allocation7], 4
      %s111 = int_to_ptr.vmem [resolvable:$true] %s110
      %116 = dma.vmem_to_hbm [thread:$0]  %s111, 256, %s4, [#allocation4], 128, 128, 8
    $region29: #{tpu_custom_call.1} parent=1 // pred_fallthru
      _
    // Predicated region
    $region30: #{tpu_custom_call.1} parent=1 // pred_check
      _
    $region31: #{tpu_custom_call.1} parent=1 // pred_check_branch
      %118 = sbr.rel (0) target = $region33
    $region32: #{tpu_custom_call.1} parent=1 // pred_region
      %119 = dma.done [#allocation4], 256
    $region33: #{tpu_custom_call.1} parent=1 // pred_fallthru
      _
    %120 = vsyncpa [#allocation3], 1
    %121 = vsyncpa [#allocation6], 1
    %122 = vsyncpa [#allocation4], 1

</llo_original>
